<compile_context>
chip_gen: v5e
topology: v5e:2x2
jax: 0.10.0
libtpu: 0.0.40
codegen_flags: <defaults>
</compile_context>

<pallas_src>
import jax
import jax.numpy as jnp
from jax.experimental import pallas as pl
from jax.experimental.pallas import tpu as pltpu


def _cdiv(a, b):
    return -(-a // b)


def _round_up(x, m):
    return _cdiv(x, m) * m


def _make_ac_ppo_kernel(num_outputs, sub, n_sub):
    """Fused shared-MLP + (actor|critic) head, feature-major layout.

    Per grid step:
      x_ref   : (num_inputs, tm)         batch on the lane axis
      w1t_ref : (h1, num_inputs) bf16    b1_ref: (h1, 1) f32
      w2t_ref : (h2, h1)        bf16     b2_ref: (h2, 1) f32
      wht_ref : (head_rows, h2) f32      bh_ref: (head_rows, 1) f32
      out_ref : (head_rows, tm) f32      rows [0:num_outputs] = tanh(actor),
                                         row num_outputs     = critic value
    """

    def kernel(x_ref, w1t_ref, b1_ref, w2t_ref, b2_ref, wht_ref, bh_ref, out_ref):
        # Load the (tiny) resident parameters once per grid step.
        w1t = w1t_ref[...]
        b1 = b1_ref[...]
        w2t = w2t_ref[...]
        b2 = b2_ref[...]
        wht = wht_ref[...]
        bh = bh_ref[...]

        def body(c, carry):
            j = pl.multiple_of(c * sub, sub)
            # bf16 MXU inputs, f32 accumulation.
            x = x_ref[:, pl.ds(j, sub)].astype(jnp.bfloat16)
            h1 = jnp.dot(w1t, x, preferred_element_type=jnp.float32) + b1
            h1 = jnp.maximum(h1, 0.0)
            h2 = jnp.dot(w2t, h1.astype(jnp.bfloat16),
                         preferred_element_type=jnp.float32) + b2
            h2 = jnp.maximum(h2, 0.0)
            # Fused head: actor rows + critic row in one small-M f32 matmul
            # (head weights are O(1e-3); keep them full precision).
            head = jnp.dot(wht, h2, preferred_element_type=jnp.float32) + bh
            row = jax.lax.broadcasted_iota(jnp.int32, head.shape, 0)
            # Lane-dense store of the combined slab: tanh only on actor rows.
            out_ref[:, pl.ds(j, sub)] = jnp.where(
                row < num_outputs, jnp.tanh(head), head)
            return carry

        # Unrolled sub-chunk loop bounds vreg live ranges for large tiles.
        jax.lax.fori_loop(0, n_sub, body, 0, unroll=True)

    return kernel


def _choose_tiling(B, block_m, lane=128):
    """Batch (lane-axis) tiling: tm multiple of 128, bounded padding, and >=2
    (preferably even) grid steps when the batch allows it so both v7x
    TensorCores get work."""
    bp_min = _round_up(B, lane)

    def plan(n):
        tm = _round_up(_cdiv(bp_min, n), lane)
        return tm, n * tm

    num_tiles = _cdiv(bp_min, block_m)
    if num_tiles == 1 and bp_min >= 2 * lane:
        num_tiles = 2
    tm, bp = plan(num_tiles)
    if num_tiles > 1 and num_tiles % 2 == 1:   # prefer an even step count
        tm_e, bp_e = plan(num_tiles + 1)
        if bp_e <= bp:
            num_tiles, tm, bp = num_tiles + 1, tm_e, bp_e
    return tm, bp, num_tiles


def actor_critic_ppo_forward(x, params, *, block_m=512):
    """Pallas-backed ActorCritic_PPO forward.

    x: (B, num_inputs) float32 (torch.FloatTensor(x) equivalent).
    Returns (mu, sigma, value): Normal(mu, sigma) parameters and critic value.
    """
    w1t, b1, w2t, b2, wht, bh, std = params
    x = jnp.asarray(x, jnp.float32)
    B, num_inputs = x.shape
    h1 = w1t.shape[0]
    h2 = w2t.shape[0]
    head_rows = wht.shape[0]
    num_outputs = std.shape[0]

    tm, Bp, num_tiles = _choose_tiling(B, block_m)
    sub = 256 if tm % 256 == 0 else 128
    n_sub = tm // sub

    # Feature-major layout: batch lives on the lane axis.
    # TODO(synk): upstream producers should emit x as (num_inputs, B) (ideally
    # bf16) directly so this transpose/pad fuses into the producer instead of
    # being a separate XLA pass over x.
    xt = jnp.transpose(x)
    if Bp != B:
        xt = jnp.pad(xt, ((0, 0), (0, Bp - B)))

    resident = lambda shape: pl.BlockSpec(shape, lambda i: (0, 0))

    flops = 2 * Bp * (num_inputs * h1 + h1 * h2 + h2 * head_rows)
    bytes_accessed = int(
        xt.size * xt.dtype.itemsize
        + sum(int(p.size) * p.dtype.itemsize
              for p in (w1t, b1, w2t, b2, wht, bh))
        + head_rows * Bp * 4)

    out = pl.pallas_call(
        _make_ac_ppo_kernel(num_outputs, sub, n_sub),
        out_shape=jax.ShapeDtypeStruct((head_rows, Bp), jnp.float32),
        grid=(num_tiles,),
        in_specs=[
            pl.BlockSpec((num_inputs, tm), lambda i: (0, i)),   # x (batch-tiled)
            resident((h1, num_inputs)),                         # w1^T (resident)
            resident((h1, 1)),                                  # b1
            resident((h2, h1)),                                 # w2^T
            resident((h2, 1)),                                  # b2
            resident((head_rows, h2)),                          # fused head W
            resident((head_rows, 1)),                           # fused head b
        ],
        out_specs=pl.BlockSpec((head_rows, tm), lambda i: (0, i)),
        compiler_params=pltpu.CompilerParams(
            dimension_semantics=("parallel",)),
        cost_estimate=pl.CostEstimate(
            flops=flops,
            transcendentals=Bp * head_rows,
            bytes_accessed=bytes_accessed),
    )(xt, w1t, b1, w2t, b2, wht, bh)

    head = out[:, :B]                                         # (head_rows, B)
    mu = jnp.transpose(head[:num_outputs, :])                 # (B, num_outputs)
    value = jnp.transpose(head[num_outputs:num_outputs + 1, :])  # (B, 1)
    # Normal(mu, softplus(std)): sigma is parameter-only, plain-JAX glue.
    sigma = jax.nn.softplus(std)
    return mu, sigma, value


def init_actor_critic_ppo_params(key, num_inputs, num_outputs,
                                 hidden_size_1=64, hidden_size_2=64):
    """Init mimicking ActorCritic_PPO.__init__.

    Weights are stored (out_features, in_features) — nn.Linear's native layout —
    which is exactly what the feature-major kernel consumes.  Actor and critic
    heads are fused into one (head_rows, hidden_2) matrix: rows [0:num_outputs]
    = actor, row num_outputs = critic, remaining rows zero-padded to a multiple
    of 8 sublanes.
    """
    k1, k2, k3, k4, k5, k6 = jax.random.split(key, 6)

    # shared layers: default nn.Linear init U(-1/sqrt(fan_in), 1/sqrt(fan_in)).
    lim1 = 1.0 / float(jnp.sqrt(num_inputs))
    w1t = jax.random.uniform(k1, (hidden_size_1, num_inputs), jnp.float32, -lim1, lim1)
    b1 = jax.random.uniform(k2, (hidden_size_1, 1), jnp.float32, -lim1, lim1)

    lim2 = 1.0 / float(jnp.sqrt(hidden_size_1))
    w2t = jax.random.uniform(k3, (hidden_size_2, hidden_size_1), jnp.float32, -lim2, lim2)
    b2 = jax.random.uniform(k4, (hidden_size_2, 1), jnp.float32, -lim2, lim2)

    # actor / critic heads: init_weights => orthogonal * 0.001, zero bias.
    ortho = jax.nn.initializers.orthogonal()
    wa = ortho(k5, (num_outputs, hidden_size_2), jnp.float32) * 0.001
    wc = ortho(k6, (1, hidden_size_2), jnp.float32) * 0.001

    head_rows = _round_up(num_outputs + 1, 8)
    wht = jnp.concatenate([wa, wc], axis=0)
    wht = jnp.pad(wht, ((0, head_rows - (num_outputs + 1)), (0, 0)))
    bh = jnp.zeros((head_rows, 1), jnp.float32)   # both head biases are zero

    # std parameter: nn.Parameter(torch.zeros(num_outputs)).
    std = jnp.zeros((num_outputs,), jnp.float32)

    # bf16 storage for the MXU-bound shared weights; the 1e-3-scale fused head
    # weights and all biases stay f32 (precision of mu / value).
    w1t = w1t.astype(jnp.bfloat16)
    w2t = w2t.astype(jnp.bfloat16)

    return (w1t, b1, w2t, b2, wht, bh, std)


if __name__ == "__main__":
    key = jax.random.PRNGKey(0)
    kx, kp = jax.random.split(key)

    B, NUM_INPUTS, NUM_OUTPUTS = 8, 24, 4
    x = jax.random.normal(kx, (B, NUM_INPUTS), jnp.float32)

    params = init_actor_critic_ppo_params(kp, NUM_INPUTS, NUM_OUTPUTS)

    mu, sigma, value = actor_critic_ppo_forward(x, params)
    mu, sigma, value = jax.block_until_ready((mu, sigma, value))

    # Pure-JAX reference with matching bf16-matmul / f32-accumulate precision.
    w1t, b1, w2t, b2, wht, bh, std = params
    xb = x.astype(jnp.bfloat16)
    h1 = jnp.maximum(
        jnp.dot(xb, w1t.T, preferred_element_type=jnp.float32) + b1[:, 0], 0.0)
    h2 = jnp.maximum(
        jnp.dot(h1.astype(jnp.bfloat16), w2t.T,
                preferred_element_type=jnp.float32) + b2[:, 0], 0.0)
    head = jnp.dot(h2, wht.T, preferred_element_type=jnp.float32) + bh[:, 0]
    mu_exp = jnp.tanh(head[:, :NUM_OUTPUTS])
    val_exp = head[:, NUM_OUTPUTS:NUM_OUTPUTS + 1]
    sig_exp = jax.nn.softplus(std)

    assert mu.shape == (B, NUM_OUTPUTS)
    assert value.shape == (B, 1)
    assert sigma.shape == (NUM_OUTPUTS,)
    assert jnp.allclose(mu, mu_exp, atol=1e-4, rtol=1e-4)
    assert jnp.allclose(value, val_exp, atol=1e-4, rtol=1e-4)
    assert jnp.allclose(sigma, sig_exp, atol=1e-6, rtol=1e-6)

    # TODO(synk): torch.distributions.Normal has no Pallas equivalent; the
    # wrapper returns (mu, sigma) so the caller can build the distribution.
    print("KERNEL_OK")
</pallas_src>

<mosaic_0001>
module attributes {stable_mosaic.version = 11 : i64} {
  func.func @kernel(%arg0: i32, %arg1: memref<24x128xf32, #tpu.memory_space<vmem>>, %arg2: memref<64x24xbf16, #tpu.memory_space<vmem>>, %arg3: memref<64x1xf32, #tpu.memory_space<vmem>>, %arg4: memref<64x64xbf16, #tpu.memory_space<vmem>>, %arg5: memref<64x1xf32, #tpu.memory_space<vmem>>, %arg6: memref<8x64xf32, #tpu.memory_space<vmem>>, %arg7: memref<8x1xf32, #tpu.memory_space<vmem>>, %arg8: memref<8x128xf32, #tpu.memory_space<vmem>>) attributes {dimension_semantics = [#tpu.dimension_semantics<parallel>], iteration_bounds = array<i64: 1>, scalar_prefetch = 0 : i64, scratch_operands = 0 : i64, tpu.core_type = #tpu.core_type<tc>, window_params = [{transform_indices = @transform_0, window_bounds = array<i64: 24, 128>}, {pipeline_mode = #tpu.pipeline_mode<synchronous>, transform_indices = @transform_1, window_bounds = array<i64: 64, 24>}, {pipeline_mode = #tpu.pipeline_mode<synchronous>, transform_indices = @transform_2, window_bounds = array<i64: 64, 1>}, {pipeline_mode = #tpu.pipeline_mode<synchronous>, transform_indices = @transform_3, window_bounds = array<i64: 64, 64>}, {pipeline_mode = #tpu.pipeline_mode<synchronous>, transform_indices = @transform_4, window_bounds = array<i64: 64, 1>}, {pipeline_mode = #tpu.pipeline_mode<synchronous>, transform_indices = @transform_5, window_bounds = array<i64: 8, 64>}, {pipeline_mode = #tpu.pipeline_mode<synchronous>, transform_indices = @transform_6, window_bounds = array<i64: 8, 1>}, {transform_indices = @transform_7, window_bounds = array<i64: 8, 128>}]} {
    %c0 = arith.constant 0 : index
    %c0_0 = arith.constant 0 : index
    %0 = vector.load %arg2[%c0, %c0_0] : memref<64x24xbf16, #tpu.memory_space<vmem>>, vector<64x24xbf16>
    %c0_1 = arith.constant 0 : index
    %c0_2 = arith.constant 0 : index
    %1 = vector.load %arg3[%c0_1, %c0_2] : memref<64x1xf32, #tpu.memory_space<vmem>>, vector<64x1xf32>
    %c0_3 = arith.constant 0 : index
    %c0_4 = arith.constant 0 : index
    %2 = vector.load %arg4[%c0_3, %c0_4] : memref<64x64xbf16, #tpu.memory_space<vmem>>, vector<64x64xbf16>
    %c0_5 = arith.constant 0 : index
    %c0_6 = arith.constant 0 : index
    %3 = vector.load %arg5[%c0_5, %c0_6] : memref<64x1xf32, #tpu.memory_space<vmem>>, vector<64x1xf32>
    %c0_7 = arith.constant 0 : index
    %c0_8 = arith.constant 0 : index
    %4 = vector.load %arg6[%c0_7, %c0_8] : memref<8x64xf32, #tpu.memory_space<vmem>>, vector<8x64xf32>
    %c0_9 = arith.constant 0 : index
    %c0_10 = arith.constant 0 : index
    %5 = vector.load %arg7[%c0_9, %c0_10] : memref<8x1xf32, #tpu.memory_space<vmem>>, vector<8x1xf32>
    %c0_i32 = arith.constant 0 : i32
    %c128_i32 = arith.constant 128 : i32
    %6 = arith.muli %c0_i32, %c128_i32 : i32
    %7 = tpu.assume_multiple %6, 128 : i32
    %c0_11 = arith.constant 0 : index
    %8 = arith.index_cast %7 : i32 to index
    %9 = vector.load %arg1[%c0_11, %8] : memref<24x128xf32, #tpu.memory_space<vmem>>, vector<24x128xf32>
    %10 = arith.truncf %9 : vector<24x128xf32> to vector<24x128xbf16>
    %cst = arith.constant dense<0.000000e+00> : vector<64x128xf32>
    %11 = tpu.matmul %0, %10, %cst {dimension_numbers = #tpu.dot_dimension_numbers<[1], [0], [0], [1], [0, 0, 1, 1], [], []>} : vector<64x24xbf16>, vector<24x128xbf16>, vector<64x128xf32> -> vector<64x128xf32>
    %12 = vector.broadcast %1 : vector<64x1xf32> to vector<64x128xf32>
    %13 = arith.addf %11, %12 : vector<64x128xf32>
    %cst_12 = arith.constant 0.000000e+00 : f32
    %14 = vector.broadcast %cst_12 : f32 to vector<64x128xf32>
    %15 = arith.maximumf %13, %14 : vector<64x128xf32>
    %16 = arith.truncf %15 : vector<64x128xf32> to vector<64x128xbf16>
    %cst_13 = arith.constant dense<0.000000e+00> : vector<64x128xf32>
    %17 = tpu.matmul %2, %16, %cst_13 {dimension_numbers = #tpu.dot_dimension_numbers<[1], [0], [0], [1], [0, 0, 1, 1], [], []>} : vector<64x64xbf16>, vector<64x128xbf16>, vector<64x128xf32> -> vector<64x128xf32>
    %18 = vector.broadcast %3 : vector<64x1xf32> to vector<64x128xf32>
    %19 = arith.addf %17, %18 : vector<64x128xf32>
    %cst_14 = arith.constant 0.000000e+00 : f32
    %20 = vector.broadcast %cst_14 : f32 to vector<64x128xf32>
    %21 = arith.maximumf %19, %20 : vector<64x128xf32>
    %cst_15 = arith.constant dense<0.000000e+00> : vector<8x128xf32>
    %22 = tpu.matmul %4, %21, %cst_15 {dimension_numbers = #tpu.dot_dimension_numbers<[1], [0], [0], [1], [0, 0, 1, 1], [], []>} : vector<8x64xf32>, vector<64x128xf32>, vector<8x128xf32> -> vector<8x128xf32>
    %23 = vector.broadcast %5 : vector<8x1xf32> to vector<8x128xf32>
    %24 = arith.addf %22, %23 : vector<8x128xf32>
    %25 = tpu.iota {dimensions = array<i32: 0>} : vector<8x128xi32>
    %c4_i32 = arith.constant 4 : i32
    %26 = vector.broadcast %c4_i32 : i32 to vector<8x128xi32>
    %27 = arith.cmpi slt, %25, %26 : vector<8x128xi32>
    %28 = math.tanh %24 : vector<8x128xf32>
    %29 = arith.select %27, %28, %24 : vector<8x128xi1>, vector<8x128xf32>
    %c0_16 = arith.constant 0 : index
    %30 = arith.index_cast %7 : i32 to index
    %31 = vector.load %arg8[%c0_16, %30] : memref<8x128xf32, #tpu.memory_space<vmem>>, vector<8x128xf32>
    tpu.vector_store %arg8[%c0_16, %30], %29 {strides = array<i32>} : memref<8x128xf32, #tpu.memory_space<vmem>>, vector<8x128xf32>,
    %c1_i32 = arith.constant 1 : i32
    return
  }
  func.func @transform_0(%arg0: i32) -> (i32, i32) {
    %c0_i32 = arith.constant 0 : i32
    %c0_i32_0 = arith.constant 0 : i32
    return %c0_i32, %arg0 : i32, i32
  }
  func.func @transform_1(%arg0: i32) -> (i32, i32) {
    %c0_i32 = arith.constant 0 : i32
    %c0_i32_0 = arith.constant 0 : i32
    %c0_i32_1 = arith.constant 0 : i32
    return %c0_i32, %c0_i32_0 : i32, i32
  }
  func.func @transform_2(%arg0: i32) -> (i32, i32) {
    %c0_i32 = arith.constant 0 : i32
    %c0_i32_0 = arith.constant 0 : i32
    %c0_i32_1 = arith.constant 0 : i32
    return %c0_i32, %c0_i32_0 : i32, i32
  }
  func.func @transform_3(%arg0: i32) -> (i32, i32) {
    %c0_i32 = arith.constant 0 : i32
    %c0_i32_0 = arith.constant 0 : i32
    %c0_i32_1 = arith.constant 0 : i32
    return %c0_i32, %c0_i32_0 : i32, i32
  }
  func.func @transform_4(%arg0: i32) -> (i32, i32) {
    %c0_i32 = arith.constant 0 : i32
    %c0_i32_0 = arith.constant 0 : i32
    %c0_i32_1 = arith.constant 0 : i32
    return %c0_i32, %c0_i32_0 : i32, i32
  }
  func.func @transform_5(%arg0: i32) -> (i32, i32) {
    %c0_i32 = arith.constant 0 : i32
    %c0_i32_0 = arith.constant 0 : i32
    %c0_i32_1 = arith.constant 0 : i32
    return %c0_i32, %c0_i32_0 : i32, i32
  }
  func.func @transform_6(%arg0: i32) -> (i32, i32) {
    %c0_i32 = arith.constant 0 : i32
    %c0_i32_0 = arith.constant 0 : i32
    %c0_i32_1 = arith.constant 0 : i32
    return %c0_i32, %c0_i32_0 : i32, i32
  }
  func.func @transform_7(%arg0: i32) -> (i32, i32) {
    %c0_i32 = arith.constant 0 : i32
    %c0_i32_0 = arith.constant 0 : i32
    return %c0_i32, %arg0 : i32, i32
  }
}

</mosaic_0001>

<llo_original>
// kernel: tpu_custom_call.1
$region0: #{tpu_custom_call.1}
  #allocation0 [shape = 'u32[]', space=smem, size = 0x4, offset = 0x4, fixed_abs, tag = 'smem constant byte address 0x4 - core index']
  #allocation1 [shape = 'u32[72,128]{1,0:T(1,128)}', space=vmem, size = 0x9000, scoped, tag = 'internal scratch']
  %s0 = inlined_call_operand.vmem [shape: f32[24,128], index: 0, kind: input, shape index: {}]
  %s1 = inlined_call_operand.vmem [shape: bf16[64,24], index: 1, kind: input, shape index: {}]
  %s2 = inlined_call_operand.vmem [shape: f32[64,1], index: 2, kind: input, shape index: {}]
  %s3 = inlined_call_operand.vmem [shape: bf16[64,64], index: 3, kind: input, shape index: {}]
  %s4 = inlined_call_operand.vmem [shape: f32[64,1], index: 4, kind: input, shape index: {}]
  %s5 = inlined_call_operand.vmem [shape: f32[8,64], index: 5, kind: input, shape index: {}]
  %s6 = inlined_call_operand.vmem [shape: f32[8,1], index: 6, kind: input, shape index: {}]
  %s7 = inlined_call_operand.hbm [shape: f32[8,128], index: 7, kind: output, shape index: {}]
  %s8 = sld [smem:[#allocation0]]
  $region38: #{tpu_custom_call.1} parent=0
    _
  %s10 = ssub.s32 1, %s8
  %s11 = scalar_select 0, %s10, %s8
  $region1: #{tpu_custom_call.1} parent=0
    #allocation2 [shape = 'u8[4096]{0}', space=vmem, size = 0x1000, scoped, tag = 'output window, operand 0, single buffered']
    #allocation3 [shape = 's32[1]{0}', space=sflag, size = 0x4, scoped, tag = 'scoped memory for tpu_custom_call.1']
    %12 = vsyncpa [#allocation3], 0
    // Predicated region
    $region2: #{tpu_custom_call.1} parent=1 // pred_check
      _
    $region3: #{tpu_custom_call.1} parent=1 // pred_check_branch
      %14 = sbr.rel (0) target = $region5
    $region4: #{tpu_custom_call.1} parent=1 // pred_region
      _
    $region5: #{tpu_custom_call.1} parent=1 // pred_fallthru
      _
    // Predicated region
    $region6: #{tpu_custom_call.1} parent=1 // pred_check
      _
    $region7: #{tpu_custom_call.1} parent=1 // pred_check_branch
      %16 = sbr.rel (0) target = $region9
    $region8: #{tpu_custom_call.1} parent=1 // pred_region
      _
    $region9: #{tpu_custom_call.1} parent=1 // pred_fallthru
      _
    // Predicated region
    $region10: #{tpu_custom_call.1} parent=1 // pred_check
      _
    $region11: #{tpu_custom_call.1} parent=1 // pred_check_branch
      %18 = sbr.rel (0) target = $region13
    $region12: #{tpu_custom_call.1} parent=1 // pred_region
      _
    $region13: #{tpu_custom_call.1} parent=1 // pred_fallthru
      _
    // Predicated region
    $region14: #{tpu_custom_call.1} parent=1 // pred_check
      _
    $region15: #{tpu_custom_call.1} parent=1 // pred_check_branch
      %20 = sbr.rel (0) target = $region17
    $region16: #{tpu_custom_call.1} parent=1 // pred_region
      _
    $region17: #{tpu_custom_call.1} parent=1 // pred_fallthru
      _
    // Predicated region
    $region18: #{tpu_custom_call.1} parent=1 // pred_check
      _
    $region19: #{tpu_custom_call.1} parent=1 // pred_check_branch
      %22 = sbr.rel (0) target = $region21
    $region20: #{tpu_custom_call.1} parent=1 // pred_region
      _
    $region21: #{tpu_custom_call.1} parent=1 // pred_fallthru
      _
    // Predicated region
    $region22: #{tpu_custom_call.1} parent=1 // pred_check
      _
    $region23: #{tpu_custom_call.1} parent=1 // pred_check_branch
      %24 = sbr.rel (0) target = $region25
    $region24: #{tpu_custom_call.1} parent=1 // pred_region
      _
    $region25: #{tpu_custom_call.1} parent=1 // pred_fallthru
      _
    // Predicated region
    $region26: #{tpu_custom_call.1} parent=1 // pred_check
      _
    $region27: #{tpu_custom_call.1} parent=1 // pred_check_branch
      %26 = sbr.rel (0) target = $region29
    $region28: #{tpu_custom_call.1} parent=1 // pred_region
      _
    $region29: #{tpu_custom_call.1} parent=1 // pred_fallthru
      _
    %v28 = vld [vmem:[%s1] sm:$0xf]
    %v29 = vld [vmem:[%s1 + $0x4] sm:$0xf]
    %v30 = vld [vmem:[%s1 + $0x8] sm:$0xf]
    %v31 = vld [vmem:[%s1 + $0xc] sm:$0xf]
    %v32 = vld [vmem:[%s1 + $0x10] sm:$0xf]
    %v33 = vld [vmem:[%s1 + $0x14] sm:$0xf]
    %v34 = vld [vmem:[%s1 + $0x18] sm:$0xf]
    %v35 = vld [vmem:[%s1 + $0x1c] sm:$0xf]
    %v36 = vld [vmem:[%s2] sm:$0xff]
    %v37 = vld [vmem:[%s2 + $0x8] sm:$0xff]
    %v38 = vld [vmem:[%s2 + $0x10] sm:$0xff]
    %v39 = vld [vmem:[%s2 + $0x18] sm:$0xff]
    %v40 = vld [vmem:[%s2 + $0x20] sm:$0xff]
    %v41 = vld [vmem:[%s2 + $0x28] sm:$0xff]
    %v42 = vld [vmem:[%s2 + $0x30] sm:$0xff]
    %v43 = vld [vmem:[%s2 + $0x38] sm:$0xff]
    %v44 = vld [vmem:[%s3] sm:$0xf]
    %v45 = vld [vmem:[%s3 + $0x4] sm:$0xf]
    %v46 = vld [vmem:[%s3 + $0x8] sm:$0xf]
    %v47 = vld [vmem:[%s3 + $0xc] sm:$0xf]
    %v48 = vld [vmem:[%s3 + $0x10] sm:$0xf]
    %v49 = vld [vmem:[%s3 + $0x14] sm:$0xf]
    %v50 = vld [vmem:[%s3 + $0x18] sm:$0xf]
    %v51 = vld [vmem:[%s3 + $0x1c] sm:$0xf]
    %v52 = vld [vmem:[%s4] sm:$0xff]
    %v53 = vld [vmem:[%s4 + $0x8] sm:$0xff]
    %v54 = vld [vmem:[%s4 + $0x10] sm:$0xff]
    %v55 = vld [vmem:[%s4 + $0x18] sm:$0xff]
    %v56 = vld [vmem:[%s4 + $0x20] sm:$0xff]
    %v57 = vld [vmem:[%s4 + $0x28] sm:$0xff]
    %v58 = vld [vmem:[%s4 + $0x30] sm:$0xff]
    %v59 = vld [vmem:[%s4 + $0x38] sm:$0xff]
    %v60 = vld [vmem:[%s5] sm:$0xff]
    %v61 = vld [vmem:[%s6] sm:$0xff]
    %v62 = vld [vmem:[%s0] sm:$0xff]
    %v63 = vld [vmem:[%s0 + $0x8] sm:$0xff]
    %v64 = vld [vmem:[%s0 + $0x10] sm:$0xff]
    %v65 = vpack.c.bf16 %v63, %v62
    %v66 = vpack.c.bf16 %v64, %v64
    %68 = vset.pattern.permute.xlu0 0
    %69 = vperm.xlu0 %68, %v36
    %v70 = vpop.permute.xlu0 %69
    %73 = vset.pattern.permute.xlu0 0
    %74 = vperm.xlu0 %73, %v37
    %v75 = vpop.permute.xlu0 %74
    %78 = vset.pattern.permute.xlu0 0
    %79 = vperm.xlu0 %78, %v38
    %v80 = vpop.permute.xlu0 %79
    %83 = vset.pattern.permute.xlu0 0
    %84 = vperm.xlu0 %83, %v39
    %v85 = vpop.permute.xlu0 %84
    %88 = vset.pattern.permute.xlu0 0
    %89 = vperm.xlu0 %88, %v40
    %v90 = vpop.permute.xlu0 %89
    %93 = vset.pattern.permute.xlu0 0
    %94 = vperm.xlu0 %93, %v41
    %v95 = vpop.permute.xlu0 %94
    %98 = vset.pattern.permute.xlu0 0
    %99 = vperm.xlu0 %98, %v42
    %v100 = vpop.permute.xlu0 %99
    %103 = vset.pattern.permute.xlu0 0
    %104 = vperm.xlu0 %103, %v43
    %v105 = vpop.permute.xlu0 %104
    %v115 = vunpack.c.l.b16 %v28
    %v116 = vunpack.c.l.b16 %v29
    %v117 = vunpack.c.l.b16 %v30
    %v118 = vunpack.c.l.b16 %v31
    %v119 = vunpack.c.l.b16 %v32
    %v120 = vunpack.c.l.b16 %v33
    %v121 = vunpack.c.l.b16 %v34
    %v122 = vunpack.c.l.b16 %v35
    %v123 = vpack.c.b16 %v116, %v115
    %v124 = vpack.c.b16 %v118, %v117
    %v125 = vpack.c.b16 %v120, %v119
    %v126 = vpack.c.b16 %v122, %v121
    %vm127 = vcmask 195584
    %v129 = vsel %vm127, %v123, 0
    %v132 = vsel %vm127, %v124, 0
    %v135 = vsel %vm127, %v125, 0
    %v138 = vsel %vm127, %v126, 0
    %vm140 = vcmask 1043456
    %v142 = vsel %vm140, %v66, 0
    %144 = vmatpush.bf16.msra.mxu0 0
    %145 = vmatpush.bf16.msra.mxu0 0
    %146 = vmatpush.bf16.msra.mxu0 0
    %147 = vmatpush.bf16.msra.mxu0 0
    %148 = vmatpush.bf16.msra.mxu0 0
    %149 = vmatpush.bf16.msra.mxu0 0
    %150 = vmatpush.bf16.msra.mxu0 %v142
    %151 = vmatpush.bf16.msra.mxu0 %v65
    %152 = vmatmul.bf16.gmra.mxu0 %v129
    %v153 = vpop.f32.mrf.mxu0
    %v154 = vadd.f32 %v70, %v153
    %v155 = vpop.f32.mrf.mxu0
    %v156 = vadd.f32 %v75, %v155
    %157 = vmatmul.bf16.gmra.mxu0 %v132
    %v158 = vpop.f32.mrf.mxu0
    %v159 = vadd.f32 %v80, %v158
    %v160 = vpop.f32.mrf.mxu0
    %v161 = vadd.f32 %v85, %v160
    %162 = vmatmul.bf16.gmra.mxu0 %v135
    %v163 = vpop.f32.mrf.mxu0
    %v164 = vadd.f32 %v90, %v163
    %v165 = vpop.f32.mrf.mxu0
    %v166 = vadd.f32 %v95, %v165
    %167 = vmatmul.bf16.gmra.mxu0 %v138
    %v168 = vpop.f32.mrf.mxu0
    %v169 = vadd.f32 %v100, %v168
    %v170 = vpop.f32.mrf.mxu0
    %v171 = vadd.f32 %v105, %v170
    %172 = vdwg.mxu0
    %v173 = vmax.f32 %v154, 0.0
    %v174 = vmax.f32 %v156, 0.0
    %v175 = vmax.f32 %v159, 0.0
    %v176 = vmax.f32 %v161, 0.0
    %v177 = vmax.f32 %v164, 0.0
    %v178 = vmax.f32 %v166, 0.0
    %v179 = vmax.f32 %v169, 0.0
    %v180 = vmax.f32 %v171, 0.0
    %v181 = vpack.c.bf16 %v174, %v173
    %v182 = vpack.c.bf16 %v176, %v175
    %v183 = vpack.c.bf16 %v178, %v177
    %v184 = vpack.c.bf16 %v180, %v179
    %186 = vset.pattern.permute.xlu0 0
    %187 = vperm.xlu0 %186, %v52
    %v188 = vpop.permute.xlu0 %187
    %191 = vset.pattern.permute.xlu0 0
    %192 = vperm.xlu0 %191, %v53
    %v193 = vpop.permute.xlu0 %192
    %196 = vset.pattern.permute.xlu0 0
    %197 = vperm.xlu0 %196, %v54
    %v198 = vpop.permute.xlu0 %197
    %201 = vset.pattern.permute.xlu0 0
    %202 = vperm.xlu0 %201, %v55
    %v203 = vpop.permute.xlu0 %202
    %206 = vset.pattern.permute.xlu0 0
    %207 = vperm.xlu0 %206, %v56
    %v208 = vpop.permute.xlu0 %207
    %211 = vset.pattern.permute.xlu0 0
    %212 = vperm.xlu0 %211, %v57
    %v213 = vpop.permute.xlu0 %212
    %216 = vset.pattern.permute.xlu0 0
    %217 = vperm.xlu0 %216, %v58
    %v218 = vpop.permute.xlu0 %217
    %221 = vset.pattern.permute.xlu0 0
    %222 = vperm.xlu0 %221, %v59
    %v223 = vpop.permute.xlu0 %222
    %v233 = vunpack.c.l.b16 %v44
    %v234 = vunpack.c.l.b16 %v45
    %v235 = vunpack.c.l.b16 %v46
    %v236 = vunpack.c.l.b16 %v47
    %v237 = vunpack.c.l.b16 %v48
    %v238 = vunpack.c.l.b16 %v49
    %v239 = vunpack.c.l.b16 %v50
    %v240 = vunpack.c.l.b16 %v51
    %v241 = vpack.c.b16 %v234, %v233
    %v242 = vpack.c.b16 %v236, %v235
    %v243 = vpack.c.b16 %v238, %v237
    %v244 = vpack.c.b16 %v240, %v239
    %vm245 = vcmask 523264
    %v247 = vsel %vm245, %v241, 0
    %v250 = vsel %vm245, %v242, 0
    %v253 = vsel %vm245, %v243, 0
    %v256 = vsel %vm245, %v244, 0
    %258 = vmatpush.bf16.msra.mxu0 0
    %259 = vmatpush.bf16.msra.mxu0 0
    %260 = vmatpush.bf16.msra.mxu0 0
    %261 = vmatpush.bf16.msra.mxu0 0
    %262 = vmatpush.bf16.msra.mxu0 %v184
    %263 = vmatpush.bf16.msra.mxu0 %v183
    %264 = vmatpush.bf16.msra.mxu0 %v182
    %265 = vmatpush.bf16.msra.mxu0 %v181
    %266 = vmatmul.bf16.gmra.mxu0 %v247
    %v267 = vpop.f32.mrf.mxu0
    %v268 = vadd.f32 %v188, %v267
    %v269 = vpop.f32.mrf.mxu0
    %v270 = vadd.f32 %v193, %v269
    %271 = vmatmul.bf16.gmra.mxu0 %v250
    %v272 = vpop.f32.mrf.mxu0
    %v273 = vadd.f32 %v198, %v272
    %v274 = vpop.f32.mrf.mxu0
    %v275 = vadd.f32 %v203, %v274
    %276 = vmatmul.bf16.gmra.mxu0 %v253
    %v277 = vpop.f32.mrf.mxu0
    %v278 = vadd.f32 %v208, %v277
    %v279 = vpop.f32.mrf.mxu0
    %v280 = vadd.f32 %v213, %v279
    %281 = vmatmul.bf16.gmra.mxu0 %v256
    %v282 = vpop.f32.mrf.mxu0
    %v283 = vadd.f32 %v218, %v282
    %v284 = vpop.f32.mrf.mxu0
    %v285 = vadd.f32 %v223, %v284
    %286 = vdwg.mxu0
    %v287 = vmax.f32 %v268, 0.0
    %v288 = vmax.f32 %v270, 0.0
    %v289 = vmax.f32 %v273, 0.0
    %v290 = vmax.f32 %v275, 0.0
    %v291 = vmax.f32 %v278, 0.0
    %v292 = vmax.f32 %v280, 0.0
    %v293 = vmax.f32 %v283, 0.0
    %v294 = vmax.f32 %v285, 0.0
    %296 = vset.pattern.permute.xlu0 0
    %297 = vperm.xlu0 %296, %v61
    %v298 = vpop.permute.xlu0 %297
    %v301 = vsel %vm245, %v60, 0
    %303 = vmatpush.msra.mxu0 0.0
    %304 = vmatpush.msra.mxu0 0.0
    %305 = vmatpush.msra.mxu0 0.0
    %306 = vmatpush.msra.mxu0 0.0
    %307 = vmatpush.msra.mxu0 0.0
    %308 = vmatpush.msra.mxu0 0.0
    %309 = vmatpush.msra.mxu0 0.0
    %310 = vmatpush.msra.mxu0 0.0
    %311 = vmatpush.msra.mxu0 %v294
    %312 = vmatpush.msra.mxu0 %v293
    %313 = vmatpush.msra.mxu0 %v292
    %314 = vmatpush.msra.mxu0 %v291
    %315 = vmatpush.msra.mxu0 %v290
    %316 = vmatpush.msra.mxu0 %v289
    %317 = vmatpush.msra.mxu0 %v288
    %318 = vmatpush.msra.mxu0 %v287
    %319 = vmatmul.f32.gmra.mxu0 %v301
    %v320 = vpop.f32.mrf.mxu0
    %v321 = vadd.f32 %v298, %v320
    %322 = vdwg.mxu0
    %v323 = vlaneseq
    %v324 = vshrl.u32 %v323, 7
    %vm325 = vcmp.lt.s32.totalorder %v324, 4
    %v326 = vtanh.pop %v321
    %v327 = vsel %vm325, %v326, %v321
    %328 = vst [vmem:[#allocation2] sm:$0xff] %v327
    // Predicated region
    $region30: #{tpu_custom_call.1} parent=1 // pred_check
      _
    $region31: #{tpu_custom_call.1} parent=1 // pred_check_branch
      %330 = sbr.rel (0) target = $region33
    $region32: #{tpu_custom_call.1} parent=1 // pred_region
      %332 = vsyncadd [#allocation3], 0
      %s334 = sshll.u32 [#allocation2], 4
      %s335 = int_to_ptr.vmem [resolvable:$true] %s334
      %s336 = sshll.u32 %s7, 4
      %s337 = int_to_ptr.hbm [resolvable:$true] %s336
      %339 = dma.vmem_to_hbm [thread:$0]  %s335, 128, %s337, [#allocation3]
    $region33: #{tpu_custom_call.1} parent=1 // pred_fallthru
      _
    // Predicated region
    $region34: #{tpu_custom_call.1} parent=1 // pred_check
      _
    $region35: #{tpu_custom_call.1} parent=1 // pred_check_branch
      %341 = sbr.rel (0) target = $region37
    $region36: #{tpu_custom_call.1} parent=1 // pred_region
      %343 = dma.done [#allocation3], 128
    $region37: #{tpu_custom_call.1} parent=1 // pred_fallthru
      _
    %344 = vsyncpa [#allocation3], 1

</llo_original>
